<compile_context>
chip_gen: v6e
topology: v6e:2x2x1
jax: 0.10.0
libtpu: 0.0.40
codegen_flags: <defaults>
</compile_context>

<pallas_src>
import functools

import jax
import jax.numpy as jnp
from jax.experimental import pallas as pl
from jax.experimental.pallas import tpu as pltpu


def _round_up(x, m):
    return (x + m - 1) // m * m


def _choose_class_tile(b_pad, c, class_tile=None, target_f32_bytes=2 << 20):
    """Lane-aligned class tile so each streamed block carries ~target_f32_bytes of f32 work."""
    c_aligned = _round_up(c, 128)
    if c <= 128:
        return c                      # single full-width block (full-dim last axis is legal)
    per_col = max(1, b_pad) * 4       # f32 working bytes per class column
    tc = max(128, (target_f32_bytes // per_col) // 128 * 128)
    tc = min(tc, c_aligned)
    if class_tile is not None:
        tc = min(tc, max(128, _round_up(class_tile, 128)))
    return tc


def combined_loss_kernel(outputs_ref, features_ref, targets_ref, out_ref,
                         m_acc, l_acc, sumz_acc, zt_acc, *,
                         num_classes, num_cols, valid_b, epsilon, margin,
                         lambda_ce, lambda_tri, needs_mask):
    c_idx = pl.program_id(0)
    n_c = pl.num_programs(0)
    B, TC = outputs_ref.shape

    tgt = targets_ref[...]                                           # [B, 1] int32

    # ---- init running stats on the first class tile --------------------------
    @pl.when(c_idx == 0)
    def _init():
        m_acc[...] = jnp.full_like(m_acc, -jnp.inf)
        l_acc[...] = jnp.zeros_like(l_acc)
        sumz_acc[...] = jnp.zeros_like(sumz_acc)
        zt_acc[...] = jnp.zeros_like(zt_acc)

    # ---- online label-smoothed CE accumulation over this class tile ----------
    def accumulate(masked):
        logits = outputs_ref[...].astype(jnp.float32)                # [B, TC] f32 (cast in VMEM)
        local_ids = jax.lax.broadcasted_iota(jnp.int32, (B, TC), 1)
        if masked:
            # Only the ragged last tile can hold out-of-bounds garbage lanes.
            valid = local_ids < (num_cols - c_idx * TC)              # offset folded to scalar
            stats_logits = jnp.where(valid, logits, -jnp.inf)
            sumz_tile = jnp.sum(jnp.where(valid, logits, 0.0), axis=1, keepdims=True)
        else:
            stats_logits = logits
            sumz_tile = jnp.sum(logits, axis=1, keepdims=True)

        tile_max = jnp.max(stats_logits, axis=1, keepdims=True)      # [B, 1]
        m_old = m_acc[...]
        m_new = jnp.maximum(m_old, tile_max)
        p = jnp.exp(stats_logits - m_new)                            # masked lanes -> exp(-inf)=0
        l_acc[...] = l_acc[...] * jnp.exp(m_old - m_new) + jnp.sum(p, axis=1, keepdims=True)
        m_acc[...] = m_new
        sumz_acc[...] = sumz_acc[...] + sumz_tile
        # logit at the target class (each row's target lives in exactly one tile)
        zt_acc[...] = zt_acc[...] + jnp.sum(
            jnp.where(local_ids == (tgt - c_idx * TC), logits, 0.0),
            axis=1, keepdims=True)

    is_last = c_idx == n_c - 1
    if needs_mask:
        @pl.when(jnp.logical_not(is_last))
        def _steady():
            accumulate(masked=False)

        @pl.when(is_last)
        def _ragged():
            accumulate(masked=True)
    else:
        accumulate(masked=False)

    # ---- finalize on the last class tile --------------------------------------
    @pl.when(is_last)
    def _finalize():
        row_valid = jax.lax.broadcasted_iota(jnp.int32, (B, 1), 0) < valid_b   # [B, 1]

        # Fused label-smoothed CE:
        #   ce_b = (1-eps)*(LSE_b - z[b,t_b]) + (eps/num_classes)*(C*LSE_b - sum_c z[b,c])
        lse = m_acc[...] + jnp.log(l_acc[...])                       # [B, 1]
        ce_rows = ((1.0 - epsilon) * (lse - zt_acc[...])
                   + (epsilon / num_classes) * (num_cols * lse - sumz_acc[...]))
        loss_ce = jnp.sum(jnp.where(row_valid, ce_rows, 0.0)) / valid_b

        # Triplet loss, hard mining on SQUARED distances (sqrt only on the 2B winners).
        feats_raw = features_ref[...]                                # native dtype -> MXU
        feats = feats_raw.astype(jnp.float32)
        sq = jnp.sum(feats * feats, axis=1, keepdims=True)           # [B, 1] f32
        gram = jax.lax.dot_general(
            feats_raw, feats_raw,
            dimension_numbers=(((1,), (1,)), ((), ())),              # contract last dims
            preferred_element_type=jnp.float32)                      # [B, B] f32
        dist2 = sq + sq.T - 2.0 * gram                               # [B, B]

        same = tgt == tgt.T                                          # positive mask [B, B]
        col_valid = jax.lax.broadcasted_iota(jnp.int32, (1, B), 1) < valid_b
        neg_mask = jnp.logical_and(jnp.logical_not(same), col_valid)

        ap2 = jnp.max(jnp.where(same, dist2, -jnp.inf), axis=1, keepdims=True)     # hardest pos (sq)
        an2 = jnp.min(jnp.where(neg_mask, dist2, jnp.inf), axis=1, keepdims=True)  # hardest neg (sq)
        dist_ap = jnp.sqrt(jnp.maximum(ap2, 1e-12))                  # only 2B sqrts
        dist_an = jnp.sqrt(jnp.maximum(an2, 1e-12))
        hinge = jnp.maximum(dist_ap - dist_an + margin, 0.0)         # MarginRankingLoss(y=1)
        loss_tri = jnp.sum(jnp.where(row_valid, hinge, 0.0)) / valid_b

        total = lambda_ce * loss_ce + lambda_tri * loss_tri
        out_ref[0] = total
        out_ref[1] = loss_ce
        out_ref[2] = loss_tri


def combined_loss(outputs, features, targets, *, num_classes,
                  margin=0.3, epsilon=0.1, lambda_ce=1.0, lambda_tri=1.0,
                  class_tile=None):
    """Returns (total_loss, loss_ce, loss_tri) as f32 scalars."""
    B, C = outputs.shape
    _, D = features.shape
    out_item = jnp.dtype(outputs.dtype).itemsize
    feat_item = jnp.dtype(features.dtype).itemsize

    # Pad the batch to a multiple of 8 only when needed (no class-dim pad at all);
    # padded rows are masked out of every reduction inside the kernel.
    B_pad = _round_up(B, 8)
    if B_pad != B:
        outputs = jnp.pad(outputs, ((0, B_pad - B), (0, 0)))
        features = jnp.pad(features, ((0, B_pad - B), (0, 0)))
        targets_2d = jnp.pad(targets.astype(jnp.int32), (0, B_pad - B),
                             constant_values=-1).reshape(-1, 1)
    else:
        targets_2d = targets.astype(jnp.int32).reshape(B, 1)

    # Lane-aligned class tile sized for ~2 MiB of f32 work per streamed block.
    TC = _choose_class_tile(B_pad, C, class_tile)
    n_c = (C + TC - 1) // TC
    needs_mask = (n_c * TC) != C         # only then can the last tile hold garbage lanes

    kernel = functools.partial(
        combined_loss_kernel,
        num_classes=num_classes, num_cols=C, valid_b=B,
        epsilon=float(epsilon), margin=float(margin),
        lambda_ce=float(lambda_ce), lambda_tri=float(lambda_tri),
        needs_mask=needs_mask)

    # VMEM budget: double-buffered logits tile + per-tile f32/int temporaries +
    # resident features/targets (double-buffered by the pipeline) + accumulators +
    # [B,B] finalize temporaries.  Clamped to <= 32 MiB (safe on v7x as well as v5e/v6e).
    est = (2 * B_pad * TC * out_item                  # streamed logits tiles
           + 5 * B_pad * TC * 4                       # f32 cast / iota / mask / exp temporaries
           + 2 * B_pad * D * feat_item                # resident features
           + 2 * B_pad * 128 * 4                      # targets (lane-padded)
           + 4 * B_pad * 128 * 4                      # [B,1] accumulators (lane-padded)
           + 6 * B_pad * _round_up(B_pad, 128) * 4    # gram / dist2 / masks in finalize
           + (2 << 20))                               # headroom
    vmem_limit = int(min(32 << 20, max(4 << 20, est)))

    res = pl.pallas_call(
        kernel,
        out_shape=jax.ShapeDtypeStruct((3,), jnp.float32),
        grid_spec=pltpu.PrefetchScalarGridSpec(
            num_scalar_prefetch=0,
            grid=(n_c,),
            in_specs=[
                pl.BlockSpec((B_pad, TC), lambda c: (0, c)),      # stream class tiles (ragged last)
                pl.BlockSpec((B_pad, D), lambda c: (0, 0)),       # features resident
                pl.BlockSpec((B_pad, 1), lambda c: (0, 0)),       # targets resident
            ],
            out_specs=pl.BlockSpec((3,), lambda c: (0,),
                                   memory_space=pltpu.MemorySpace.SMEM),
            scratch_shapes=[pltpu.VMEM((B_pad, 1), jnp.float32)] * 4,
        ),
        compiler_params=pltpu.CompilerParams(
            dimension_semantics=("arbitrary",),
            vmem_limit_bytes=vmem_limit),
    )(outputs, features, targets_2d)
    return res[0], res[1], res[2]


def combined_loss_ref(outputs, features, targets, *, num_classes,
                      margin=0.3, epsilon=0.1, lambda_ce=1.0, lambda_tri=1.0):
    """Pure-JAX reference mirroring the PyTorch semantics."""
    logits = outputs.astype(jnp.float32)
    log_probs = jax.nn.log_softmax(logits, axis=1)
    onehot = jax.nn.one_hot(targets, num_classes, dtype=jnp.float32)
    smooth = (1.0 - epsilon) * onehot + epsilon / num_classes
    loss_ce = jnp.sum(jnp.mean(-smooth * log_probs, axis=0))

    feats = features.astype(jnp.float32)
    sq = jnp.sum(feats * feats, axis=1, keepdims=True)
    dist = jnp.sqrt(jnp.maximum(sq + sq.T - 2.0 * feats @ feats.T, 1e-12))
    same = targets[:, None] == targets[None, :]
    dist_ap = jnp.max(jnp.where(same, dist, -jnp.inf), axis=1)
    dist_an = jnp.min(jnp.where(same, jnp.inf, dist), axis=1)
    loss_tri = jnp.mean(jnp.maximum(dist_ap - dist_an + margin, 0.0))
    return lambda_ce * loss_ce + lambda_tri * loss_tri, loss_ce, loss_tri


if __name__ == "__main__":
    key = jax.random.PRNGKey(0)
    keys = jax.random.split(key, 6)

    # ---- test 1: small aligned shapes (single class tile, no masking) --------
    B, C, D = 8, 16, 32
    outputs = jax.random.normal(keys[0], (B, C), dtype=jnp.float32)
    features = jax.random.normal(keys[1], (B, D), dtype=jnp.float32)
    targets = jnp.array([0, 1, 2, 3, 0, 1, 2, 3], dtype=jnp.int32)

    got = combined_loss(outputs, features, targets, num_classes=C)
    jax.block_until_ready(got[0])
    ref = combined_loss_ref(outputs, features, targets, num_classes=C)
    for g, r in zip(got, ref):
        assert jnp.allclose(g, r, rtol=1e-4, atol=1e-5), (g, r)

    # ---- test 2: unaligned batch/classes + custom params ---------------------
    B2, C2, D2 = 6, 10, 32
    outputs2 = jax.random.normal(keys[2], (B2, C2), dtype=jnp.float32)
    features2 = jax.random.normal(keys[3], (B2, D2), dtype=jnp.float32)
    targets2 = jnp.array([0, 1, 2, 0, 1, 2], dtype=jnp.int32)
    kw = dict(num_classes=C2, margin=0.25, epsilon=0.15, lambda_ce=0.7, lambda_tri=1.3)

    got2 = combined_loss(outputs2, features2, targets2, **kw)
    jax.block_until_ready(got2[0])
    ref2 = combined_loss_ref(outputs2, features2, targets2, **kw)
    for g, r in zip(got2, ref2):
        assert jnp.allclose(g, r, rtol=1e-4, atol=1e-5), (g, r)

    # ---- test 3: multi-tile class streaming with a ragged (masked) last tile -
    B3, C3, D3 = 8, 300, 64
    outputs3 = jax.random.normal(keys[4], (B3, C3), dtype=jnp.float32)
    features3 = jax.random.normal(keys[5], (B3, D3), dtype=jnp.float32)
    targets3 = jnp.array([5, 130, 260, 299, 5, 130, 260, 299], dtype=jnp.int32)

    got3 = combined_loss(outputs3, features3, targets3, num_classes=C3, class_tile=128)
    jax.block_until_ready(got3[0])
    ref3 = combined_loss_ref(outputs3, features3, targets3, num_classes=C3)
    for g, r in zip(got3, ref3):
        assert jnp.allclose(g, r, rtol=1e-2, atol=1e-2), (g, r)

    # ---- test 4: native bf16 logits/features stay bf16 in HBM ----------------
    outputs4 = outputs3.astype(jnp.bfloat16)
    features4 = features3.astype(jnp.bfloat16)
    got4 = combined_loss(outputs4, features4, targets3, num_classes=C3, class_tile=128)
    jax.block_until_ready(got4[0])
    ref4 = combined_loss_ref(outputs4, features4, targets3, num_classes=C3)
    for g, r in zip(got4, ref4):
        assert jnp.allclose(g, r, rtol=1e-2, atol=1e-2), (g, r)

    print("KERNEL_OK")
</pallas_src>

<mosaic_0001>
module attributes {stable_mosaic.version = 11 : i64} {
  func.func @combined_loss_kernel(%arg0: i32, %arg1: memref<8x16xf32, #tpu.memory_space<vmem>>, %arg2: memref<8x32xf32, #tpu.memory_space<vmem>>, %arg3: memref<8x1xi32, #tpu.memory_space<vmem>>, %arg4: memref<3xf32, #tpu.memory_space<smem>>, %arg5: memref<8x1xf32, #tpu.memory_space<vmem>>, %arg6: memref<8x1xf32, #tpu.memory_space<vmem>>, %arg7: memref<8x1xf32, #tpu.memory_space<vmem>>, %arg8: memref<8x1xf32, #tpu.memory_space<vmem>>) attributes {dimension_semantics = [#tpu.dimension_semantics<arbitrary>], iteration_bounds = array<i64: 1>, scalar_prefetch = 0 : i64, scratch_operands = 4 : i64, tpu.core_type = #tpu.core_type<tc>, window_params = [{transform_indices = @transform_0, window_bounds = array<i64: 8, 16>}, {pipeline_mode = #tpu.pipeline_mode<synchronous>, transform_indices = @transform_1, window_bounds = array<i64: 8, 32>}, {pipeline_mode = #tpu.pipeline_mode<synchronous>, transform_indices = @transform_2, window_bounds = array<i64: 8, 1>}, {transform_indices = @transform_3, window_bounds = array<i64: 3>}]} {
    %c0 = arith.constant 0 : index
    %c0_0 = arith.constant 0 : index
    %0 = vector.load %arg3[%c0, %c0_0] : memref<8x1xi32, #tpu.memory_space<vmem>>, vector<8x1xi32>
    %c0_i32 = arith.constant 0 : i32
    %1 = arith.cmpi eq, %arg0, %c0_i32 : i32
    %2 = arith.extui %1 : i1 to i32
    %c0_i32_1 = arith.constant 0 : i32
    %3 = arith.cmpi ne, %2, %c0_i32_1 : i32
    scf.if %3 {
      %cst_26 = arith.constant 0xFF800000 : f32
      %42 = vector.broadcast %cst_26 : f32 to vector<8x1xf32>
      %c0_27 = arith.constant 0 : index
      %c0_28 = arith.constant 0 : index
      %43 = vector.load %arg5[%c0_27, %c0_28] : memref<8x1xf32, #tpu.memory_space<vmem>>, vector<8x1xf32>
      tpu.vector_store %arg5[%c0_27, %c0_28], %42 {strides = array<i32>} : memref<8x1xf32, #tpu.memory_space<vmem>>, vector<8x1xf32>,
      %cst_29 = arith.constant 0.000000e+00 : f32
      %44 = vector.broadcast %cst_29 : f32 to vector<8x1xf32>
      %c0_30 = arith.constant 0 : index
      %c0_31 = arith.constant 0 : index
      %45 = vector.load %arg6[%c0_30, %c0_31] : memref<8x1xf32, #tpu.memory_space<vmem>>, vector<8x1xf32>
      tpu.vector_store %arg6[%c0_30, %c0_31], %44 {strides = array<i32>} : memref<8x1xf32, #tpu.memory_space<vmem>>, vector<8x1xf32>,
      %cst_32 = arith.constant 0.000000e+00 : f32
      %46 = vector.broadcast %cst_32 : f32 to vector<8x1xf32>
      %c0_33 = arith.constant 0 : index
      %c0_34 = arith.constant 0 : index
      %47 = vector.load %arg7[%c0_33, %c0_34] : memref<8x1xf32, #tpu.memory_space<vmem>>, vector<8x1xf32>
      tpu.vector_store %arg7[%c0_33, %c0_34], %46 {strides = array<i32>} : memref<8x1xf32, #tpu.memory_space<vmem>>, vector<8x1xf32>,
      %cst_35 = arith.constant 0.000000e+00 : f32
      %48 = vector.broadcast %cst_35 : f32 to vector<8x1xf32>
      %c0_36 = arith.constant 0 : index
      %c0_37 = arith.constant 0 : index
      %49 = vector.load %arg8[%c0_36, %c0_37] : memref<8x1xf32, #tpu.memory_space<vmem>>, vector<8x1xf32>
      tpu.vector_store %arg8[%c0_36, %c0_37], %48 {strides = array<i32>} : memref<8x1xf32, #tpu.memory_space<vmem>>, vector<8x1xf32>,
    } else {
    }
    %c0_i32_2 = arith.constant 0 : i32
    %4 = arith.cmpi eq, %arg0, %c0_i32_2 : i32
    %c0_3 = arith.constant 0 : index
    %c0_4 = arith.constant 0 : index
    %5 = vector.load %arg1[%c0_3, %c0_4] : memref<8x16xf32, #tpu.memory_space<vmem>>, vector<8x16xf32>
    %6 = tpu.iota {dimensions = array<i32: 1>} : vector<8x16xi32>
    %cst = arith.constant dense<0.000000e+00> : vector<8xf32>
    %7 = vector.multi_reduction <add>, %5, %cst [1] : vector<8x16xf32> to vector<8xf32>
    %8 = vector.shape_cast %7 : vector<8xf32> to vector<8x1xf32>
    %cst_5 = arith.constant dense<0xFF800000> : vector<8xf32>
    %9 = vector.multi_reduction <maximumf>, %5, %cst_5 [1] : vector<8x16xf32> to vector<8xf32>
    %10 = vector.shape_cast %9 : vector<8xf32> to vector<8x1xf32>
    %c0_6 = arith.constant 0 : index
    %c0_7 = arith.constant 0 : index
    %11 = vector.load %arg5[%c0_6, %c0_7] : memref<8x1xf32, #tpu.memory_space<vmem>>, vector<8x1xf32>
    %12 = arith.maximumf %11, %10 : vector<8x1xf32>
    %13 = vector.broadcast %12 : vector<8x1xf32> to vector<8x16xf32>
    %14 = arith.subf %5, %13 : vector<8x16xf32>
    %15 = math.exp %14 : vector<8x16xf32>
    %c0_8 = arith.constant 0 : index
    %c0_9 = arith.constant 0 : index
    %16 = vector.load %arg6[%c0_8, %c0_9] : memref<8x1xf32, #tpu.memory_space<vmem>>, vector<8x1xf32>
    %17 = arith.subf %11, %12 : vector<8x1xf32>
    %18 = math.exp %17 : vector<8x1xf32>
    %19 = arith.mulf %16, %18 : vector<8x1xf32>
    %cst_10 = arith.constant dense<0.000000e+00> : vector<8xf32>
    %20 = vector.multi_reduction <add>, %15, %cst_10 [1] : vector<8x16xf32> to vector<8xf32>
    %21 = vector.shape_cast %20 : vector<8xf32> to vector<8x1xf32>
    %22 = arith.addf %19, %21 : vector<8x1xf32>
    %c0_11 = arith.constant 0 : index
    %c0_12 = arith.constant 0 : index
    %23 = vector.load %arg6[%c0_11, %c0_12] : memref<8x1xf32, #tpu.memory_space<vmem>>, vector<8x1xf32>
    tpu.vector_store %arg6[%c0_11, %c0_12], %22 {strides = array<i32>} : memref<8x1xf32, #tpu.memory_space<vmem>>, vector<8x1xf32>,
    %c0_13 = arith.constant 0 : index
    %c0_14 = arith.constant 0 : index
    %24 = vector.load %arg5[%c0_13, %c0_14] : memref<8x1xf32, #tpu.memory_space<vmem>>, vector<8x1xf32>
    tpu.vector_store %arg5[%c0_13, %c0_14], %12 {strides = array<i32>} : memref<8x1xf32, #tpu.memory_space<vmem>>, vector<8x1xf32>,
    %c0_15 = arith.constant 0 : index
    %c0_16 = arith.constant 0 : index
    %25 = vector.load %arg7[%c0_15, %c0_16] : memref<8x1xf32, #tpu.memory_space<vmem>>, vector<8x1xf32>
    %26 = arith.addf %25, %8 : vector<8x1xf32>
    %c0_17 = arith.constant 0 : index
    %c0_18 = arith.constant 0 : index
    %27 = vector.load %arg7[%c0_17, %c0_18] : memref<8x1xf32, #tpu.memory_space<vmem>>, vector<8x1xf32>
    tpu.vector_store %arg7[%c0_17, %c0_18], %26 {strides = array<i32>} : memref<8x1xf32, #tpu.memory_space<vmem>>, vector<8x1xf32>,
    %c0_19 = arith.constant 0 : index
    %c0_20 = arith.constant 0 : index
    %28 = vector.load %arg8[%c0_19, %c0_20] : memref<8x1xf32, #tpu.memory_space<vmem>>, vector<8x1xf32>
    %c16_i32 = arith.constant 16 : i32
    %29 = arith.muli %arg0, %c16_i32 : i32
    %30 = vector.broadcast %29 : i32 to vector<8x1xi32>
    %31 = arith.subi %0, %30 : vector<8x1xi32>
    %32 = vector.broadcast %31 : vector<8x1xi32> to vector<8x16xi32>
    %33 = arith.cmpi eq, %6, %32 : vector<8x16xi32>
    %cst_21 = arith.constant 0.000000e+00 : f32
    %34 = vector.broadcast %cst_21 : f32 to vector<8x16xf32>
    %35 = arith.select %33, %5, %34 : vector<8x16xi1>, vector<8x16xf32>
    %cst_22 = arith.constant dense<0.000000e+00> : vector<8xf32>
    %36 = vector.multi_reduction <add>, %35, %cst_22 [1] : vector<8x16xf32> to vector<8xf32>
    %37 = vector.shape_cast %36 : vector<8xf32> to vector<8x1xf32>
    %38 = arith.addf %28, %37 : vector<8x1xf32>
    %c0_23 = arith.constant 0 : index
    %c0_24 = arith.constant 0 : index
    %39 = vector.load %arg8[%c0_23, %c0_24] : memref<8x1xf32, #tpu.memory_space<vmem>>, vector<8x1xf32>
    tpu.vector_store %arg8[%c0_23, %c0_24], %38 {strides = array<i32>} : memref<8x1xf32, #tpu.memory_space<vmem>>, vector<8x1xf32>,
    %40 = arith.extui %4 : i1 to i32
    %c0_i32_25 = arith.constant 0 : i32
    %41 = arith.cmpi ne, %40, %c0_i32_25 : i32
    scf.if %41 {
      %42 = tpu.iota {dimensions = array<i32: 0>} : vector<8x1xi32>
      %c8_i32 = arith.constant 8 : i32
      %43 = vector.broadcast %c8_i32 : i32 to vector<8x1xi32>
      %44 = arith.cmpi slt, %42, %43 : vector<8x1xi32>
      %c0_26 = arith.constant 0 : index
      %c0_27 = arith.constant 0 : index
      %45 = vector.load %arg5[%c0_26, %c0_27] : memref<8x1xf32, #tpu.memory_space<vmem>>, vector<8x1xf32>
      %c0_28 = arith.constant 0 : index
      %c0_29 = arith.constant 0 : index
      %46 = vector.load %arg6[%c0_28, %c0_29] : memref<8x1xf32, #tpu.memory_space<vmem>>, vector<8x1xf32>
      %47 = math.log %46 : vector<8x1xf32>
      %48 = arith.addf %45, %47 : vector<8x1xf32>
      %c0_30 = arith.constant 0 : index
      %c0_31 = arith.constant 0 : index
      %49 = vector.load %arg8[%c0_30, %c0_31] : memref<8x1xf32, #tpu.memory_space<vmem>>, vector<8x1xf32>
      %50 = arith.subf %48, %49 : vector<8x1xf32>
      %cst_32 = arith.constant 0.899999976 : f32
      %51 = vector.broadcast %cst_32 : f32 to vector<8x1xf32>
      %52 = arith.mulf %51, %50 : vector<8x1xf32>
      %cst_33 = arith.constant 1.600000e+01 : f32
      %53 = vector.broadcast %cst_33 : f32 to vector<8x1xf32>
      %54 = arith.mulf %53, %48 : vector<8x1xf32>
      %c0_34 = arith.constant 0 : index
      %c0_35 = arith.constant 0 : index
      %55 = vector.load %arg7[%c0_34, %c0_35] : memref<8x1xf32, #tpu.memory_space<vmem>>, vector<8x1xf32>
      %56 = arith.subf %54, %55 : vector<8x1xf32>
      %cst_36 = arith.constant 6.250000e-03 : f32
      %57 = vector.broadcast %cst_36 : f32 to vector<8x1xf32>
      %58 = arith.mulf %57, %56 : vector<8x1xf32>
      %59 = arith.addf %52, %58 : vector<8x1xf32>
      %cst_37 = arith.constant 0.000000e+00 : f32
      %60 = vector.broadcast %cst_37 : f32 to vector<8x1xf32>
      %61 = arith.select %44, %59, %60 : vector<8x1xi1>, vector<8x1xf32>
      %62 = vector.shape_cast %61 : vector<8x1xf32> to vector<1x8x1xf32>
      %cst_38 = arith.constant dense<0.000000e+00> : vector<1xf32>
      %63 = vector.multi_reduction <add>, %62, %cst_38 [1, 2] : vector<1x8x1xf32> to vector<1xf32>
      %64 = vector.shape_cast %63 : vector<1xf32> to vector<1x1x1xf32>
      %65 = vector.extract %64[0, 0, 0] : f32 from vector<1x1x1xf32>
      %cst_39 = arith.constant 8.000000e+00 : f32
      %66 = arith.divf %65, %cst_39 : f32
      %c0_40 = arith.constant 0 : index
      %c0_41 = arith.constant 0 : index
      %67 = vector.load %arg2[%c0_40, %c0_41] : memref<8x32xf32, #tpu.memory_space<vmem>>, vector<8x32xf32>
      %68 = arith.mulf %67, %67 : vector<8x32xf32>
      %cst_42 = arith.constant dense<0.000000e+00> : vector<8xf32>
      %69 = vector.multi_reduction <add>, %68, %cst_42 [1] : vector<8x32xf32> to vector<8xf32>
      %70 = vector.shape_cast %69 : vector<8xf32> to vector<8x1xf32>
      %cst_43 = arith.constant dense<0.000000e+00> : vector<8x8xf32>
      %71 = tpu.matmul %67, %67, %cst_43 {dimension_numbers = #tpu.dot_dimension_numbers<[1], [1], [0], [0], [0, 0, 1, 0], [], []>} : vector<8x32xf32>, vector<8x32xf32>, vector<8x8xf32> -> vector<8x8xf32>
      %72 = tpu.transpose %70, [1, 0] : vector<8x1xf32> -> vector<1x8xf32>
      %73 = vector.broadcast %70 : vector<8x1xf32> to vector<8x8xf32>
      %74 = vector.broadcast %72 : vector<1x8xf32> to vector<8x8xf32>
      %75 = arith.addf %73, %74 : vector<8x8xf32>
      %cst_44 = arith.constant 2.000000e+00 : f32
      %76 = vector.broadcast %cst_44 : f32 to vector<8x8xf32>
      %77 = arith.mulf %76, %71 : vector<8x8xf32>
      %78 = arith.subf %75, %77 : vector<8x8xf32>
      %79 = tpu.transpose %0, [1, 0] : vector<8x1xi32> -> vector<1x8xi32>
      %80 = vector.broadcast %0 : vector<8x1xi32> to vector<8x8xi32>
      %81 = vector.broadcast %79 : vector<1x8xi32> to vector<8x8xi32>
      %82 = arith.cmpi eq, %80, %81 : vector<8x8xi32>
      %83 = tpu.iota {dimensions = array<i32: 1>} : vector<1x8xi32>
      %c8_i32_45 = arith.constant 8 : i32
      %84 = vector.broadcast %c8_i32_45 : i32 to vector<1x8xi32>
      %85 = arith.cmpi slt, %83, %84 : vector<1x8xi32>
      %cst_46 = arith.constant dense<true> : vector<8x8xi1>
      %86 = arith.xori %82, %cst_46 : vector<8x8xi1>
      %87 = vector.broadcast %85 : vector<1x8xi1> to vector<8x8xi1>
      %88 = arith.andi %86, %87 : vector<8x8xi1>
      %cst_47 = arith.constant 0xFF800000 : f32
      %89 = vector.broadcast %cst_47 : f32 to vector<8x8xf32>
      %90 = arith.select %82, %78, %89 : vector<8x8xi1>, vector<8x8xf32>
      %cst_48 = arith.constant dense<0xFF800000> : vector<8xf32>
      %91 = vector.multi_reduction <maximumf>, %90, %cst_48 [1] : vector<8x8xf32> to vector<8xf32>
      %92 = vector.shape_cast %91 : vector<8xf32> to vector<8x1xf32>
      %cst_49 = arith.constant 0x7F800000 : f32
      %93 = vector.broadcast %cst_49 : f32 to vector<8x8xf32>
      %94 = arith.select %88, %78, %93 : vector<8x8xi1>, vector<8x8xf32>
      %cst_50 = arith.constant dense<0x7F800000> : vector<8xf32>
      %95 = vector.multi_reduction <minimumf>, %94, %cst_50 [1] : vector<8x8xf32> to vector<8xf32>
      %96 = vector.shape_cast %95 : vector<8xf32> to vector<8x1xf32>
      %cst_51 = arith.constant 9.99999996E-13 : f32
      %97 = vector.broadcast %cst_51 : f32 to vector<8x1xf32>
      %98 = arith.maximumf %92, %97 : vector<8x1xf32>
      %99 = math.sqrt %98 : vector<8x1xf32>
      %cst_52 = arith.constant 9.99999996E-13 : f32
      %100 = vector.broadcast %cst_52 : f32 to vector<8x1xf32>
      %101 = arith.maximumf %96, %100 : vector<8x1xf32>
      %102 = math.sqrt %101 : vector<8x1xf32>
      %103 = arith.subf %99, %102 : vector<8x1xf32>
      %cst_53 = arith.constant 3.000000e-01 : f32
      %104 = vector.broadcast %cst_53 : f32 to vector<8x1xf32>
      %105 = arith.addf %103, %104 : vector<8x1xf32>
      %cst_54 = arith.constant 0.000000e+00 : f32
      %106 = vector.broadcast %cst_54 : f32 to vector<8x1xf32>
      %107 = arith.maximumf %105, %106 : vector<8x1xf32>
      %cst_55 = arith.constant 0.000000e+00 : f32
      %108 = vector.broadcast %cst_55 : f32 to vector<8x1xf32>
      %109 = arith.select %44, %107, %108 : vector<8x1xi1>, vector<8x1xf32>
      %110 = vector.shape_cast %109 : vector<8x1xf32> to vector<1x8x1xf32>
      %cst_56 = arith.constant dense<0.000000e+00> : vector<1xf32>
      %111 = vector.multi_reduction <add>, %110, %cst_56 [1, 2] : vector<1x8x1xf32> to vector<1xf32>
      %112 = vector.shape_cast %111 : vector<1xf32> to vector<1x1x1xf32>
      %113 = vector.extract %112[0, 0, 0] : f32 from vector<1x1x1xf32>
      %cst_57 = arith.constant 8.000000e+00 : f32
      %114 = arith.divf %113, %cst_57 : f32
      %cst_58 = arith.constant 1.000000e+00 : f32
      %115 = arith.mulf %cst_58, %66 : f32
      %cst_59 = arith.constant 1.000000e+00 : f32
      %116 = arith.mulf %cst_59, %114 : f32
      %117 = arith.addf %115, %116 : f32
      %c0_60 = arith.constant 0 : index
      %118 = memref.load %arg4[%c0_60] : memref<3xf32, #tpu.memory_space<smem>>
      memref.store %117, %arg4[%c0_60] : memref<3xf32, #tpu.memory_space<smem>>
      %c1 = arith.constant 1 : index
      %119 = memref.load %arg4[%c1] : memref<3xf32, #tpu.memory_space<smem>>
      memref.store %66, %arg4[%c1] : memref<3xf32, #tpu.memory_space<smem>>
      %c2 = arith.constant 2 : index
      %120 = memref.load %arg4[%c2] : memref<3xf32, #tpu.memory_space<smem>>
      memref.store %114, %arg4[%c2] : memref<3xf32, #tpu.memory_space<smem>>
    } else {
    }
    return
  }
  func.func @transform_0(%arg0: i32) -> (i32, i32) {
    %c0_i32 = arith.constant 0 : i32
    %c0_i32_0 = arith.constant 0 : i32
    return %c0_i32, %arg0 : i32, i32
  }
  func.func @transform_1(%arg0: i32) -> (i32, i32) {
    %c0_i32 = arith.constant 0 : i32
    %c0_i32_0 = arith.constant 0 : i32
    %c0_i32_1 = arith.constant 0 : i32
    return %c0_i32, %c0_i32_0 : i32, i32
  }
  func.func @transform_2(%arg0: i32) -> (i32, i32) {
    %c0_i32 = arith.constant 0 : i32
    %c0_i32_0 = arith.constant 0 : i32
    %c0_i32_1 = arith.constant 0 : i32
    return %c0_i32, %c0_i32_0 : i32, i32
  }
  func.func @transform_3(%arg0: i32) -> i32 {
    %c0_i32 = arith.constant 0 : i32
    %c0_i32_0 = arith.constant 0 : i32
    return %c0_i32 : i32
  }
}

</mosaic_0001>

<llo_original>
// kernel: tpu_custom_call.1
$region0: #{tpu_custom_call.1}
  #allocation0 [shape = 'u32[]', space=smem, size = 0x4, offset = 0x4, fixed_abs, tag = 'smem constant byte address 0x4 - core index']
  #allocation1 [shape = 'u32[144,128]{1,0:T(1,128)}', space=vmem, size = 0x12000, scoped, tag = 'internal scratch']
  #allocation2 [shape = 'f32[8,1]{1,0:T(8,128)}', space=vmem, size = 0x1000, scoped, tag = 'scratch operand']
  #allocation3 [shape = 'f32[8,1]{1,0:T(8,128)}', space=vmem, size = 0x1000, scoped, tag = 'scratch operand']
  #allocation4 [shape = 'f32[8,1]{1,0:T(8,128)}', space=vmem, size = 0x1000, scoped, tag = 'scratch operand']
  #allocation5 [shape = 'f32[8,1]{1,0:T(8,128)}', space=vmem, size = 0x1000, scoped, tag = 'scratch operand']
  %s0 = inlined_call_operand.vmem [shape: f32[8,16], index: 0, kind: input, shape index: {}]
  %s1 = inlined_call_operand.hbm [shape: f32[8,32], index: 1, kind: input, shape index: {}]
  %s2 = inlined_call_operand.vmem [shape: s32[8,1], index: 2, kind: input, shape index: {}]
  %s3 = inlined_call_operand.hbm [shape: f32[3], index: 3, kind: output, shape index: {}]
  %s4 = sld [smem:[#allocation0]]
  $region34: #{tpu_custom_call.1} parent=0
    _
  %s6 = ssub.s32 1, %s4
  %s7 = scalar_select 0, %s6, %s4
  $region1: #{tpu_custom_call.1} parent=0
    #allocation6 [shape = 'u8[4096]{0}', space=vmem, size = 0x1000, scoped, tag = 'input window, operand 1, single buffered']
    #allocation7 [shape = 's32[1]{0}', space=sflag, size = 0x4, scoped, tag = 'scoped memory for tpu_custom_call.1']
    #allocation8 [shape = 's32[1]{0}', space=sflag, size = 0x4, scoped, tag = 'scoped memory for tpu_custom_call.1']
    #allocation9 [shape = 'u8[512]{0}', space=smem, size = 0x200, scoped, tag = 'output window, operand 0, single buffered']
    %8 = vsyncpa [#allocation7], 0
    %9 = vsyncpa [#allocation8], 0
    // Predicated region
    $region2: #{tpu_custom_call.1} parent=1 // pred_check
      _
    $region3: #{tpu_custom_call.1} parent=1 // pred_check_branch
      %11 = sbr.rel (0) target = $region5
    $region4: #{tpu_custom_call.1} parent=1 // pred_region
      _
    $region5: #{tpu_custom_call.1} parent=1 // pred_fallthru
      _
    // Predicated region
    $region6: #{tpu_custom_call.1} parent=1 // pred_check
      _
    $region7: #{tpu_custom_call.1} parent=1 // pred_check_branch
      %13 = sbr.rel (0) target = $region9
    $region8: #{tpu_custom_call.1} parent=1 // pred_region
      %s15 = ssub.s32 128, 128
      %16 = vsyncadd [#allocation7], %s15
      %s18 = sshll.u32 [#allocation6], 4
      %s19 = int_to_ptr.vmem [resolvable:$true] %s18
      %21 = dma.hbm_to_vmem [thread:$0]  %s1, 128, %s19, [#allocation7]
    $region9: #{tpu_custom_call.1} parent=1 // pred_fallthru
      _
    // Predicated region
    $region10: #{tpu_custom_call.1} parent=1 // pred_check
      _
    $region11: #{tpu_custom_call.1} parent=1 // pred_check_branch
      %23 = sbr.rel (0) target = $region13
    $region12: #{tpu_custom_call.1} parent=1 // pred_region
      _
    $region13: #{tpu_custom_call.1} parent=1 // pred_fallthru
      _
    // Predicated region
    $region14: #{tpu_custom_call.1} parent=1 // pred_check
      _
    $region15: #{tpu_custom_call.1} parent=1 // pred_check_branch
      %25 = sbr.rel (0) target = $region17
    $region16: #{tpu_custom_call.1} parent=1 // pred_region
      %26 = dma.done [#allocation7], 128
    $region17: #{tpu_custom_call.1} parent=1 // pred_fallthru
      _
    %v27 = vld [vmem:[%s2] sm:$0xff]
    %p28 = scmp.eq.s32.totalorder 0, 0
    // Predicated region
    $region18: #{tpu_custom_call.1} parent=1 // pred_check
      %p29 = pneg %p28
    $region19: #{tpu_custom_call.1} parent=1 // pred_check_branch
      %31 = sbr.rel (%p29) target = $region21
    $region20: #{tpu_custom_call.1} parent=1 // pred_region
      %vm32 = vcmask 7168
      %33 = vst.msk [vmem:[#allocation2] sm:$0xff] %vm32, -inf
      %34 = vst.msk [vmem:[#allocation3] sm:$0xff] %vm32, 0.0
      %35 = vst.msk [vmem:[#allocation4] sm:$0xff] %vm32, 0.0
      %36 = vst.msk [vmem:[#allocation5] sm:$0xff] %vm32, 0.0
    $region21: #{tpu_custom_call.1} parent=1 // pred_fallthru
      _
    %v37 = vld [vmem:[%s0] sm:$0xff]
    %v38 = vlaneseq
    %v39 = vand.u32 %v38, 127
    %vm40 = vcmask 130048
    %v41 = vsel %vm40, %v37, 0.0
    %42 = vadd.xlane.f32.xlu0 %v41
    %v43 = vpop.xlane.xlu0 %42
    %v44 = vsel %vm40, %v37, -inf
    %45 = vmax.xlane.f32.xlu0 %v44
    %v46 = vpop.xlane.xlu0 %45
    %v47 = vld [vmem:[#allocation2] sm:$0xff]
    %v48 = vmax.f32 %v47, %v46
    %50 = vset.pattern.permute.xlu0 0
    %51 = vperm.xlu0 %50, %v48
    %v52 = vpop.permute.xlu0 %51
    %v54 = vsub.f32 %v37, %v52
    %v55 = vmul.f32 %v54, 1.442695
    %v56 = vpow.pop %v55
    %v57 = vld [vmem:[#allocation3] sm:$0xff]
    %v58 = vsub.f32 %v47, %v48
    %v59 = vmul.f32 %v58, 1.442695
    %v60 = vpow.pop %v59
    %v61 = vmul.f32 %v57, %v60
    %v62 = vsel %vm40, %v56, 0.0
    %63 = vadd.xlane.f32.xlu0 %v62
    %v64 = vpop.xlane.xlu0 %63
    %v65 = vadd.f32 %v61, %v64
    %vm66 = vcmask 7168
    %67 = vst.msk [vmem:[#allocation3] sm:$0xff] %vm66, %v65
    %68 = vst.msk [vmem:[#allocation2] sm:$0xff] %vm66, %v48
    %v69 = vld [vmem:[#allocation4] sm:$0xff]
    %v70 = vadd.f32 %v69, %v43
    %71 = vst.msk [vmem:[#allocation4] sm:$0xff] %vm66, %v70
    %v72 = vld [vmem:[#allocation5] sm:$0xff]
    %s73 = smul.u32 0, 16
    %v74 = vstv %s73
    %v75 = vsub.s32 %v27, %v74
    %76 = vset.pattern.permute.xlu0 0
    %77 = vperm.xlu0 %76, %v75
    %v78 = vpop.permute.xlu0 %77
    %vm79 = vcmp.eq.s32.totalorder %v39, %v78
    %v80 = vsel %vm79, %v37, 0.0
    %v81 = vsel %vm40, %v80, 0.0
    %82 = vadd.xlane.f32.xlu0 %v81
    %v83 = vpop.xlane.xlu0 %82
    %v84 = vadd.f32 %v72, %v83
    %85 = vst.msk [vmem:[#allocation5] sm:$0xff] %vm66, %v84
    // Predicated region
    $region22: #{tpu_custom_call.1} parent=1 // pred_check
      %p86 = pneg %p28
    $region23: #{tpu_custom_call.1} parent=1 // pred_check_branch
      %88 = sbr.rel (%p86) target = $region25
    $region24: #{tpu_custom_call.1} parent=1 // pred_region
      %v89 = vlaneseq
      %v90 = vshrl.u32 %v89, 7
      %vm91 = vcmp.lt.s32.totalorder %v90, 8
      %v92 = vld [vmem:[#allocation2] sm:$0xff]
      %v93 = vld [vmem:[#allocation3] sm:$0xff]
      %v94 = vlog2.pop %v93
      %v95 = vmul.f32 %v94, 0.6931472
      %v96 = vadd.f32 %v92, %v95
      %v97 = vld [vmem:[#allocation5] sm:$0xff]
      %v98 = vsub.f32 %v96, %v97
      %v99 = vmul.f32 %v98, 0.9
      %v100 = vmul.f32 %v96, 16.0
      %v101 = vld [vmem:[#allocation4] sm:$0xff]
      %v102 = vsub.f32 %v100, %v101
      %v103 = vmul.f32 %v102, 0.00625
      %v104 = vadd.f32 %v99, %v103
      %v105 = vsel %vm91, %v104, 0.0
      %v106 = vsel %vm66, %v105, 0.0
      %107 = vadd.xlane.f32.xlu0 %v106
      %v108 = vpop.xlane.xlu0 %107
      %v109 = vrot.slane %v108, 4
      %v110 = vadd.f32 %v108, %v109
      %v111 = vrot.slane %v110, 2
      %v112 = vadd.f32 %v110, %v111
      %v113 = vrot.slane %v112, 1
      %v114 = vadd.f32 %v112, %v113
      %s115 = vtos %v114
      %v116 = vrcp.pop 8.0
      %s117 = vtos %v116
      %s118 = smul.f32 %s115, %s117
      %v119 = vld [vmem:[#allocation6] sm:$0xff]
      %v120 = vmul.f32 %v119, %v119
      %vm121 = vcmask 261120
      %v122 = vsel %vm121, %v120, 0.0
      %123 = vadd.xlane.f32.xlu0 %v122
      %v124 = vpop.xlane.xlu0 %123
      %v126 = vsel %vm121, %v119, 0
      %128 = vmatprep.subr.mxu0 0.0
      %129 = vmatpush1.xpose.msra.mxu0 0.0
      %130 = vmatprep.subr.mxu0 0.0
      %131 = vmatpush1.xpose.msra.mxu0 0.0
      %132 = vmatprep.subr.mxu0 0.0
      %133 = vmatpush1.xpose.msra.mxu0 0.0
      %134 = vmatprep.subr.mxu0 0.0
      %135 = vmatpush1.xpose.msra.mxu0 0.0
      %136 = vmatprep.subr.mxu0 0.0
      %137 = vmatpush1.xpose.msra.mxu0 0.0
      %138 = vmatprep.subr.mxu0 0.0
      %139 = vmatpush1.xpose.msra.mxu0 0.0
      %140 = vmatprep.subr.mxu0 0.0
      %141 = vmatpush1.xpose.msra.mxu0 0.0
      %142 = vmatprep.subr.mxu0 0.0
      %143 = vmatpush1.xpose.msra.mxu0 0.0
      %144 = vmatprep.subr.mxu0 0.0
      %145 = vmatpush1.xpose.msra.mxu0 0.0
      %146 = vmatprep.subr.mxu0 0.0
      %147 = vmatpush1.xpose.msra.mxu0 0.0
      %148 = vmatprep.subr.mxu0 0.0
      %149 = vmatpush1.xpose.msra.mxu0 0.0
      %150 = vmatprep.subr.mxu0 0.0
      %151 = vmatpush1.xpose.msra.mxu0 0.0
      %152 = vmatprep.subr.mxu0 0.0
      %153 = vmatpush1.xpose.msra.mxu0 0.0
      %154 = vmatprep.subr.mxu0 0.0
      %155 = vmatpush1.xpose.msra.mxu0 0.0
      %156 = vmatprep.subr.mxu0 0.0
      %157 = vmatpush1.xpose.msra.mxu0 0.0
      %158 = vmatprep.subr.mxu0 0.0
      %159 = vmatpush1.xpose.msra.mxu0 %v126
      %160 = vmatprep.subr.mxu0 0.0
      %161 = vmatpush2.xpose.msra.mxu0 0.0
      %162 = vmatprep.subr.mxu0 0.0
      %163 = vmatpush2.xpose.msra.mxu0 0.0
      %164 = vmatprep.subr.mxu0 0.0
      %165 = vmatpush2.xpose.msra.mxu0 0.0
      %166 = vmatprep.subr.mxu0 0.0
      %167 = vmatpush2.xpose.msra.mxu0 0.0
      %168 = vmatprep.subr.mxu0 0.0
      %169 = vmatpush2.xpose.msra.mxu0 0.0
      %170 = vmatprep.subr.mxu0 0.0
      %171 = vmatpush2.xpose.msra.mxu0 0.0
      %172 = vmatprep.subr.mxu0 0.0
      %173 = vmatpush2.xpose.msra.mxu0 0.0
      %174 = vmatprep.subr.mxu0 0.0
      %175 = vmatpush2.xpose.msra.mxu0 0.0
      %176 = vmatprep.subr.mxu0 0.0
      %177 = vmatpush2.xpose.msra.mxu0 0.0
      %178 = vmatprep.subr.mxu0 0.0
      %179 = vmatpush2.xpose.msra.mxu0 0.0
      %180 = vmatprep.subr.mxu0 0.0
      %181 = vmatpush2.xpose.msra.mxu0 0.0
      %182 = vmatprep.subr.mxu0 0.0
      %183 = vmatpush2.xpose.msra.mxu0 0.0
      %184 = vmatprep.subr.mxu0 0.0
      %185 = vmatpush2.xpose.msra.mxu0 0.0
      %186 = vmatprep.subr.mxu0 0.0
      %187 = vmatpush2.xpose.msra.mxu0 0.0
      %188 = vmatprep.subr.mxu0 0.0
      %189 = vmatpush2.xpose.msra.mxu0 0.0
      %190 = vmatprep.subr.mxu0 0.0
      %191 = vmatpush2.xpose.msra.mxu0 0.0
      %192 = vmatprep.mubr.f32.mxu0 0.0
      %193 = vmatmul.mubr.f32.gmra.mxu0 %v126
      %v194 = vpop.f32.mrf.mxu0
      %v195 = vadd.f32 0.0, %v194
      %v196 = vpop.f32.mrf.mxu0
      %197 = vdwg.mxu0
      %198 = vxpose.xlu0.b32.start [1/16] %v124, 128
      %199 = vxpose.xlu0.b32.cont [2/16] 0.0, 128
      %200 = vxpose.xlu0.b32.cont [3/16] 0.0, 128
      %201 = vxpose.xlu0.b32.cont [4/16] 0.0, 128
      %202 = vxpose.xlu0.b32.cont [5/16] 0.0, 128
      %203 = vxpose.xlu0.b32.cont [6/16] 0.0, 128
      %204 = vxpose.xlu0.b32.cont [7/16] 0.0, 128
      %205 = vxpose.xlu0.b32.cont [8/16] 0.0, 128
      %206 = vxpose.xlu0.b32.cont [9/16] 0.0, 128
      %207 = vxpose.xlu0.b32.cont [10/16] 0.0, 128
      %208 = vxpose.xlu0.b32.cont [11/16] 0.0, 128
      %209 = vxpose.xlu0.b32.cont [12/16] 0.0, 128
      %210 = vxpose.xlu0.b32.cont [13/16] 0.0, 128
      %211 = vxpose.xlu0.b32.cont [14/16] 0.0, 128
      %212 = vxpose.xlu0.b32.cont [15/16] 0.0, 128
      %213 = vxpose.xlu0.b32.end [16/16] 0.0, 128
      %v214 = vpop.trf.xlu0
      %v215 = vpop.trf.xlu0
      %v216 = vpop.trf.xlu0
      %v217 = vpop.trf.xlu0
      %v218 = vpop.trf.xlu0
      %v219 = vpop.trf.xlu0
      %v220 = vpop.trf.xlu0
      %v221 = vpop.trf.xlu0
      %v222 = vpop.trf.xlu0
      %v223 = vpop.trf.xlu0
      %v224 = vpop.trf.xlu0
      %v225 = vpop.trf.xlu0
      %v226 = vpop.trf.xlu0
      %v227 = vpop.trf.xlu0
      %v228 = vpop.trf.xlu0
      %v229 = vpop.trf.xlu0
      %v230 = vlaneseq
      %v231 = vshrl.u32 %v230, 7
      %v232 = vsub.s32 0, %v231
      %v233 = vrot.slane %v214, %v232
      %v234 = vadd.f32 %v124, %v233
      %v235 = vmul.f32 %v195, 2.0
      %v236 = vsub.f32 %v234, %v235
      %237 = vxpose.xlu0.b32.start [1/16] %v27, 128
      %238 = vxpose.xlu0.b32.cont [2/16] 0, 128
      %239 = vxpose.xlu0.b32.cont [3/16] 0, 128
      %240 = vxpose.xlu0.b32.cont [4/16] 0, 128
      %241 = vxpose.xlu0.b32.cont [5/16] 0, 128
      %242 = vxpose.xlu0.b32.cont [6/16] 0, 128
      %243 = vxpose.xlu0.b32.cont [7/16] 0, 128
      %244 = vxpose.xlu0.b32.cont [8/16] 0, 128
      %245 = vxpose.xlu0.b32.cont [9/16] 0, 128
      %246 = vxpose.xlu0.b32.cont [10/16] 0, 128
      %247 = vxpose.xlu0.b32.cont [11/16] 0, 128
      %248 = vxpose.xlu0.b32.cont [12/16] 0, 128
      %249 = vxpose.xlu0.b32.cont [13/16] 0, 128
      %250 = vxpose.xlu0.b32.cont [14/16] 0, 128
      %251 = vxpose.xlu0.b32.cont [15/16] 0, 128
      %252 = vxpose.xlu0.b32.end [16/16] 0, 128
      %v253 = vpop.trf.xlu0
      %v254 = vpop.trf.xlu0
      %v255 = vpop.trf.xlu0
      %v256 = vpop.trf.xlu0
      %v257 = vpop.trf.xlu0
      %v258 = vpop.trf.xlu0
      %v259 = vpop.trf.xlu0
      %v260 = vpop.trf.xlu0
      %v261 = vpop.trf.xlu0
      %v262 = vpop.trf.xlu0
      %v263 = vpop.trf.xlu0
      %v264 = vpop.trf.xlu0
      %v265 = vpop.trf.xlu0
      %v266 = vpop.trf.xlu0
      %v267 = vpop.trf.xlu0
      %v268 = vpop.trf.xlu0
      %269 = vset.pattern.permute.xlu0 0
      %270 = vperm.xlu0 %269, %v27
      %v271 = vpop.permute.xlu0 %270
      %v272 = vlaneseq
      %v273 = vshrl.u32 %v272, 7
      %v274 = vsub.s32 0, %v273
      %v275 = vrot.slane %v253, %v274
      %vm276 = vcmp.eq.s32.totalorder %v271, %v275
      %vm277 = vcmp.lt.s32.totalorder %v39, 8
      %vm278 = vmxor %vm276, 1
      %v279 = vsel %vm277, 1, 0
      %vm280 = vcmp.eq.s32.totalorder %v279, 1
      %vm281 = vmand %vm278, %vm280
      %v282 = vsel %vm276, %v236, -inf
      %vm283 = vcmask 64512
      %v284 = vsel %vm283, %v282, -inf
      %285 = vmax.xlane.f32.xlu0 %v284
      %v286 = vpop.xlane.xlu0 %285
      %v287 = vsel %vm281, %v236, inf
      %v288 = vsel %vm283, %v287, inf
      %289 = vmin.xlane.f32.xlu0 %v288
      %v290 = vpop.xlane.xlu0 %289
      %v291 = vmax.f32 %v286, 1e-12
      %v292 = vrsqrt.pop %v291
      %v293 = vmul.f32 %v291, %v292
      %vm294 = vcmp.eq.f32.partialorder %v291, inf
      %v295 = vsel %vm294, %v291, %v293
      %vm296 = vcmp.eq.f32.partialorder %v291, 0.0
      %v297 = vand.u32 %v291, 2147483648
      %v298 = vsel %vm296, %v297, %v295
      %v299 = vmax.f32 %v290, 1e-12
      %v300 = vrsqrt.pop %v299
      %v301 = vmul.f32 %v299, %v300
      %vm302 = vcmp.eq.f32.partialorder %v299, inf
      %v303 = vsel %vm302, %v299, %v301
      %vm304 = vcmp.eq.f32.partialorder %v299, 0.0
      %v305 = vand.u32 %v299, 2147483648
      %v306 = vsel %vm304, %v305, %v303
      %v307 = vsub.f32 %v298, %v306
      %v308 = vadd.f32 %v307, 0.3
      %v309 = vmax.f32 %v308, 0.0
      %v310 = vsel %vm91, %v309, 0.0
      %v311 = vsel %vm66, %v310, 0.0
      %312 = vadd.xlane.f32.xlu0 %v311
      %v313 = vpop.xlane.xlu0 %312
      %v314 = vrot.slane %v313, 4
      %v315 = vadd.f32 %v313, %v314
      %v316 = vrot.slane %v315, 2
      %v317 = vadd.f32 %v315, %v316
      %v318 = vrot.slane %v317, 1
      %v319 = vadd.f32 %v317, %v318
      %s320 = vtos %v319
      %v321 = vrcp.pop 8.0
      %s322 = vtos %v321
      %s323 = smul.f32 %s320, %s322
      %s324 = sadd.f32 %s118, %s323
      %s325 = scalar_lea.smem [#allocation9], 0
      %326 = sst [smem:[%s325]] %s324
      %s327 = scalar_lea.smem [#allocation9], 1
      %328 = sst [smem:[%s327]] %s118
      %s329 = scalar_lea.smem [#allocation9], 2
      %330 = sst [smem:[%s329]] %s323
    $region25: #{tpu_custom_call.1} parent=1 // pred_fallthru
      _
    // Predicated region
    $region26: #{tpu_custom_call.1} parent=1 // pred_check
      _
    $region27: #{tpu_custom_call.1} parent=1 // pred_check_branch
      %332 = sbr.rel (0) target = $region29
    $region28: #{tpu_custom_call.1} parent=1 // pred_region
      %s334 = ssub.s32 16, 16
      %335 = vsyncadd [#allocation8], %s334
      %338 = dma.smem_to_hbm [#allocation9], 16, %s3, [#allocation8]
    $region29: #{tpu_custom_call.1} parent=1 // pred_fallthru
      _
    // Predicated region
    $region30: #{tpu_custom_call.1} parent=1 // pred_check
      _
    $region31: #{tpu_custom_call.1} parent=1 // pred_check_branch
      %340 = sbr.rel (0) target = $region33
    $region32: #{tpu_custom_call.1} parent=1 // pred_region
      %341 = dma.done [#allocation8], 16
    $region33: #{tpu_custom_call.1} parent=1 // pred_fallthru
      _
    %342 = sfence
    %343 = vsyncpa [#allocation7], 1
    %344 = vsyncpa [#allocation8], 1

</llo_original>
